<compile_context>
chip_gen: v5e
topology: v5e:2x2
jax: 0.10.0
libtpu: 0.0.40
codegen_flags: <defaults>
</compile_context>

<pallas_src>
import functools

import jax
import jax.numpy as jnp
from jax import lax
from jax.experimental import pallas as pl
from jax.experimental.pallas import tpu as pltpu

# ----------------------- small RoBERTa-like config -----------------------
VOCAB = 100
TYPE_VOCAB = 2
MAX_POS = 32
HIDDEN = 32          # (real model: 768)
N_HEADS = 4
HEAD_DIM = HIDDEN // N_HEADS
INTERMEDIATE = 64    # (real model: 3072)
N_LAYERS = 2         # (real model: 12)
N_CLASSES = 2
LN_EPS = 1e-5
PAD_IDX = 1          # RoBERTa position ids are offset by padding_idx

MATMUL_DTYPE = jnp.bfloat16   # MXU operand dtype; accumulation is always f32

# Preferred tile sizes (multiples of 8 / 128). Small dims use the full axis
# (always a legal block); large dims that don't divide get zero-padded.
TM_PREF, TN_PREF, TK_PREF = 512, 512, 512
TM_LN_PREF = 512


def _round_up(x, m):
    return ((x + m - 1) // m) * m


def _tile_for(dim, pref, align):
    """Return (tile, padded_dim). Full axis if dim <= pref; otherwise the largest
    divisor of dim that is a multiple of `align` in [pref//4, pref]; else pad."""
    if dim <= pref:
        return dim, dim
    lo = max(align, pref // 4)
    for t in range(pref, lo - 1, -align):
        if dim % t == 0:
            return t, dim
    return pref, _round_up(dim, pref)


# ----------------------------- Pallas kernels -----------------------------
def _dense_kernel(x_ref, w_ref, b_ref, o_ref, acc_ref, *, activation):
    """Tiled bf16 matmul + f32 bias/activation epilogue, K accumulation in VMEM."""
    @pl.when(pl.program_id(2) == 0)
    def _():
        acc_ref[...] = jnp.zeros_like(acc_ref)

    acc_ref[...] += jnp.dot(x_ref[...], w_ref[...],
                            preferred_element_type=jnp.float32)

    @pl.when(pl.program_id(2) == pl.num_programs(2) - 1)
    def _():
        y = acc_ref[...] + b_ref[...]
        if activation == "gelu":
            # tanh-approx GELU (HF RoBERTa 'gelu' is erf-based; ~1e-3 difference)
            c = jnp.sqrt(2.0 / jnp.pi).astype(y.dtype)
            y = 0.5 * y * (1.0 + jnp.tanh(c * (y + 0.044715 * y * y * y)))
        o_ref[...] = y.astype(o_ref.dtype)


def dense(x, w, b, activation="none"):
    """x: (M, K), w: (K, N), b: (N,) -> (M, N) bf16. Tiled over (M, N, K)."""
    M, K = x.shape
    _, N = w.shape
    tm, Mp = _tile_for(M, TM_PREF, 8)
    tk, Kp = _tile_for(K, TK_PREF, 128)
    tn, Np = _tile_for(N, TN_PREF, 128)

    x = x.astype(MATMUL_DTYPE)
    w = w.astype(MATMUL_DTYPE)
    if (Mp, Kp) != (M, K):
        x = jnp.pad(x, ((0, Mp - M), (0, Kp - K)))
    if (Kp, Np) != (K, N):
        w = jnp.pad(w, ((0, Kp - K), (0, Np - N)))
    bb = b.reshape(1, N).astype(jnp.float32)
    if Np != N:
        bb = jnp.pad(bb, ((0, 0), (0, Np - N)))

    grid = (Mp // tm, Np // tn, Kp // tk)
    bytes_accessed = 2 * (Mp * Kp + Kp * Np + Mp * Np) + 4 * Np
    out = pl.pallas_call(
        functools.partial(_dense_kernel, activation=activation),
        out_shape=jax.ShapeDtypeStruct((Mp, Np), MATMUL_DTYPE),
        grid_spec=pltpu.PrefetchScalarGridSpec(
            num_scalar_prefetch=0,
            grid=grid,
            in_specs=[
                pl.BlockSpec((tm, tk), lambda i, j, k: (i, k)),
                pl.BlockSpec((tk, tn), lambda i, j, k: (k, j)),
                pl.BlockSpec((1, tn), lambda i, j, k: (0, j)),
            ],
            out_specs=pl.BlockSpec((tm, tn), lambda i, j, k: (i, j)),
            scratch_shapes=[pltpu.VMEM((tm, tn), jnp.float32)],
        ),
        compiler_params=pltpu.CompilerParams(
            dimension_semantics=("parallel", "parallel", "arbitrary")),
        cost_estimate=pl.CostEstimate(
            flops=2 * Mp * Np * Kp,
            transcendentals=(Mp * Np if activation == "gelu" else 0),
            bytes_accessed=bytes_accessed),
    )(x, w, bb)
    if (Mp, Np) != (M, N):
        out = out[:M, :N]
    return out


def _dense_add_ln_kernel(x_ref, w_ref, b_ref, r_ref, g_ref, bt_ref, o_ref,
                         acc_ref, *, eps):
    """Fused: (x @ w) K-accumulated in VMEM, then +bias +residual, LayerNorm."""
    @pl.when(pl.program_id(1) == 0)
    def _():
        acc_ref[...] = jnp.zeros_like(acc_ref)

    acc_ref[...] += jnp.dot(x_ref[...], w_ref[...],
                            preferred_element_type=jnp.float32)

    @pl.when(pl.program_id(1) == pl.num_programs(1) - 1)
    def _():
        y = acc_ref[...] + b_ref[...] + r_ref[...].astype(jnp.float32)
        mu = jnp.mean(y, axis=-1, keepdims=True)
        var = jnp.mean((y - mu) ** 2, axis=-1, keepdims=True)
        yn = (y - mu) * lax.rsqrt(var + eps)
        o_ref[...] = (yn * g_ref[...] + bt_ref[...]).astype(o_ref.dtype)


def dense_add_layernorm(x, w, b, residual, gamma, beta):
    """(M, K) @ (K, N) + b + residual(M, N) -> LayerNorm -> (M, N) bf16."""
    M, K = x.shape
    _, N = w.shape
    tm, Mp = _tile_for(M, TM_LN_PREF, 8)
    tk, Kp = _tile_for(K, TK_PREF, 128)

    x = x.astype(MATMUL_DTYPE)
    w = w.astype(MATMUL_DTYPE)
    residual = residual.astype(MATMUL_DTYPE)
    if (Mp, Kp) != (M, K):
        x = jnp.pad(x, ((0, Mp - M), (0, Kp - K)))
    if Kp != K:
        w = jnp.pad(w, ((0, Kp - K), (0, 0)))
    if Mp != M:
        residual = jnp.pad(residual, ((0, Mp - M), (0, 0)))

    grid = (Mp // tm, Kp // tk)
    bytes_accessed = 2 * (Mp * Kp + Kp * N + 2 * Mp * N) + 4 * 3 * N
    out = pl.pallas_call(
        functools.partial(_dense_add_ln_kernel, eps=LN_EPS),
        out_shape=jax.ShapeDtypeStruct((Mp, N), MATMUL_DTYPE),
        grid_spec=pltpu.PrefetchScalarGridSpec(
            num_scalar_prefetch=0,
            grid=grid,
            in_specs=[
                pl.BlockSpec((tm, tk), lambda i, k: (i, k)),
                pl.BlockSpec((tk, N), lambda i, k: (k, 0)),
                pl.BlockSpec((1, N), lambda i, k: (0, 0)),
                pl.BlockSpec((tm, N), lambda i, k: (i, 0)),
                pl.BlockSpec((1, N), lambda i, k: (0, 0)),
                pl.BlockSpec((1, N), lambda i, k: (0, 0)),
            ],
            out_specs=pl.BlockSpec((tm, N), lambda i, k: (i, 0)),
            scratch_shapes=[pltpu.VMEM((tm, N), jnp.float32)],
        ),
        compiler_params=pltpu.CompilerParams(
            dimension_semantics=("parallel", "arbitrary")),
        cost_estimate=pl.CostEstimate(
            flops=2 * Mp * N * Kp, transcendentals=0,
            bytes_accessed=bytes_accessed),
    )(x, w, b.reshape(1, N).astype(jnp.float32), residual,
      gamma.reshape(1, N).astype(jnp.float32),
      beta.reshape(1, N).astype(jnp.float32))
    if Mp != M:
        out = out[:M]
    return out


def _ln_kernel(x_ref, g_ref, b_ref, o_ref, *, eps):
    x = x_ref[...].astype(jnp.float32)
    mu = jnp.mean(x, axis=-1, keepdims=True)
    var = jnp.mean((x - mu) ** 2, axis=-1, keepdims=True)
    y = (x - mu) * lax.rsqrt(var + eps)
    o_ref[...] = (y * g_ref[...] + b_ref[...]).astype(o_ref.dtype)


def layernorm(x, gamma, beta):
    """Plain LayerNorm over last dim; f32 math, bf16 output."""
    M, H = x.shape
    tm, Mp = _tile_for(M, TM_LN_PREF, 8)
    if Mp != M:
        x = jnp.pad(x, ((0, Mp - M), (0, 0)))
    out = pl.pallas_call(
        functools.partial(_ln_kernel, eps=LN_EPS),
        out_shape=jax.ShapeDtypeStruct((Mp, H), MATMUL_DTYPE),
        grid=(Mp // tm,),
        in_specs=[
            pl.BlockSpec((tm, H), lambda i: (i, 0)),
            pl.BlockSpec((1, H), lambda i: (0, 0)),
            pl.BlockSpec((1, H), lambda i: (0, 0)),
        ],
        out_specs=pl.BlockSpec((tm, H), lambda i: (i, 0)),
        compiler_params=pltpu.CompilerParams(dimension_semantics=("parallel",)),
    )(x, gamma.reshape(1, H).astype(jnp.float32),
      beta.reshape(1, H).astype(jnp.float32))
    if Mp != M:
        out = out[:M]
    return out


def _attn_kernel(q_ref, k_ref, v_ref, m_ref, o_ref, *, scale):
    """One (batch, head) per grid step; head selection done by BlockSpec index_map."""
    q = q_ref[0, 0]                    # (S, dH) bf16
    k = k_ref[0, 0]                    # (S, dH) bf16
    v = v_ref[0, 0]                    # (S, dH) bf16
    m = m_ref[0]                       # (1, S)  f32 additive mask
    # QK^T: contract the last dims directly -- no explicit transpose.
    s = lax.dot_general(q, k, (((1,), (1,)), ((), ())),
                        preferred_element_type=jnp.float32)
    s = s * scale + m
    s = s - jnp.max(s, axis=-1, keepdims=True)
    p = jnp.exp(s)
    p = p * pl.reciprocal(jnp.sum(p, axis=-1, keepdims=True), approx=True)
    ctx = jnp.dot(p.astype(v.dtype), v, preferred_element_type=jnp.float32)
    # Single full-block store (lane-dense for this head-major output layout).
    o_ref[0, 0, :, :] = ctx.astype(o_ref.dtype)


def attention(q, k, v, add_mask):
    """q/k/v: (B, nH, S, dH) head-major bf16; add_mask: (B, 1, S) additive f32."""
    B, nH, S, dH = q.shape
    scale = 1.0 / float(dH) ** 0.5
    # TODO(synk): for real HEAD_DIM=64 on v6e/v7x (256-wide MXU), pack two heads'
    # 64-dim slices into one 128-wide QK^T contraction to fill the array.
    return pl.pallas_call(
        functools.partial(_attn_kernel, scale=scale),
        out_shape=jax.ShapeDtypeStruct((B, nH, S, dH), q.dtype),
        grid=(B, nH),
        in_specs=[
            pl.BlockSpec((1, 1, S, dH), lambda b, h: (b, h, 0, 0)),
            pl.BlockSpec((1, 1, S, dH), lambda b, h: (b, h, 0, 0)),
            pl.BlockSpec((1, 1, S, dH), lambda b, h: (b, h, 0, 0)),
            pl.BlockSpec((1, 1, S), lambda b, h: (b, 0, 0)),
        ],
        out_specs=pl.BlockSpec((1, 1, S, dH), lambda b, h: (b, h, 0, 0)),
        compiler_params=pltpu.CompilerParams(
            dimension_semantics=("parallel", "parallel")),
        cost_estimate=pl.CostEstimate(
            flops=4 * B * nH * S * S * dH,
            transcendentals=B * nH * S * S,
            bytes_accessed=4 * B * nH * S * dH * 2 + B * S * 4),
    )(q, k, v, add_mask)


def _pool_cls_kernel(x_ref, wp_ref, bp_ref, wc_ref, bc_ref, o_ref):
    """Fused pooler tanh(cls @ Wp + bp) -> (dropout=identity) -> Linear(H, 2).
    Note: the 2-wide logits store is a masked vst; the work here is negligible."""
    pooled = jnp.tanh(
        jnp.dot(x_ref[...], wp_ref[...], preferred_element_type=jnp.float32)
        + bp_ref[...])
    logits = jnp.dot(pooled.astype(wc_ref.dtype), wc_ref[...],
                     preferred_element_type=jnp.float32) + bc_ref[...]
    o_ref[...] = logits.astype(o_ref.dtype)


def pool_and_classify(cls_tok, wp, bp, wc, bc):
    B, H = cls_tok.shape
    C = wc.shape[1]
    return pl.pallas_call(
        _pool_cls_kernel,
        out_shape=jax.ShapeDtypeStruct((B, C), jnp.float32),
        grid=(1,),
        in_specs=[
            pl.BlockSpec((B, H), lambda i: (0, 0)),
            pl.BlockSpec((H, H), lambda i: (0, 0)),
            pl.BlockSpec((1, H), lambda i: (0, 0)),
            pl.BlockSpec((H, C), lambda i: (0, 0)),
            pl.BlockSpec((1, C), lambda i: (0, 0)),
        ],
        out_specs=pl.BlockSpec((B, C), lambda i: (0, 0)),
    )(cls_tok.astype(MATMUL_DTYPE), wp.astype(MATMUL_DTYPE),
      bp.reshape(1, H).astype(jnp.float32), wc.astype(MATMUL_DTYPE),
      bc.reshape(1, C).astype(jnp.float32))


# ------------------------------ parameters -------------------------------
def init_params(key):
    def nrm(k, shape, dtype, scale=0.02):
        return (scale * jax.random.normal(k, shape)).astype(dtype)

    keys = iter(jax.random.split(key, 8 + 8 * N_LAYERS))
    p = {
        # Embedding tables stay f32 (gather + LN path), matmul weights are bf16.
        "word_emb": nrm(next(keys), (VOCAB, HIDDEN), jnp.float32),
        "pos_emb": nrm(next(keys), (MAX_POS, HIDDEN), jnp.float32),
        "type_emb": nrm(next(keys), (TYPE_VOCAB, HIDDEN), jnp.float32),
        "emb_ln_g": jnp.ones((HIDDEN,), jnp.float32),
        "emb_ln_b": jnp.zeros((HIDDEN,), jnp.float32),
        "layers": [],
        "pool_w": nrm(next(keys), (HIDDEN, HIDDEN), MATMUL_DTYPE),
        "pool_b": jnp.zeros((HIDDEN,), jnp.float32),
        "cls_w": nrm(next(keys), (HIDDEN, N_CLASSES), MATMUL_DTYPE),
        "cls_b": jnp.zeros((N_CLASSES,), jnp.float32),
    }
    for _ in range(N_LAYERS):
        p["layers"].append({
            # Fused Q|K|V projection weight (H, 3H) and bias (3H,)
            "w_qkv": nrm(next(keys), (HIDDEN, 3 * HIDDEN), MATMUL_DTYPE),
            "b_qkv": jnp.zeros((3 * HIDDEN,), jnp.float32),
            "wo": nrm(next(keys), (HIDDEN, HIDDEN), MATMUL_DTYPE),
            "bo": jnp.zeros((HIDDEN,), jnp.float32),
            "ln1_g": jnp.ones((HIDDEN,), jnp.float32),
            "ln1_b": jnp.zeros((HIDDEN,), jnp.float32),
            "w1": nrm(next(keys), (HIDDEN, INTERMEDIATE), MATMUL_DTYPE),
            "b1": jnp.zeros((INTERMEDIATE,), jnp.float32),
            "w2": nrm(next(keys), (INTERMEDIATE, HIDDEN), MATMUL_DTYPE),
            "b2": jnp.zeros((HIDDEN,), jnp.float32),
            "ln2_g": jnp.ones((HIDDEN,), jnp.float32),
            "ln2_b": jnp.zeros((HIDDEN,), jnp.float32),
        })
    return p


# ------------------------------ forward pass ------------------------------
def roberta_classifier_forward(params, ids, mask, token_type_ids):
    B, S = ids.shape
    H = HIDDEN

    # --- embeddings (gathers are glue in plain JAX) ---
    # HF RoBERTa position ids: cumsum over the pad mask; matches HF exactly when
    # the caller's mask equals (ids != padding_idx).
    mask_i = mask.astype(jnp.int32)
    pos_ids = jnp.cumsum(mask_i, axis=1) * mask_i + PAD_IDX
    emb = (params["word_emb"][ids]
           + params["pos_emb"][pos_ids]
           + params["type_emb"][token_type_ids])
    x = layernorm(emb.reshape(B * S, H).astype(jnp.float32),
                  params["emb_ln_g"], params["emb_ln_b"])          # bf16 (B*S, H)

    # additive attention mask: 0 where attend, large negative where padded (f32)
    add_mask = ((1.0 - mask.astype(jnp.float32)) * -1e9).reshape(B, 1, S)

    # --- encoder layers ---
    for lp in params["layers"]:
        h = x
        qkv = dense(h, lp["w_qkv"], lp["b_qkv"])                    # (B*S, 3H) bf16
        # Head-major layout so the attention BlockSpec selects heads for free
        # (transposes are XLA glue outside the kernels).
        qkv = qkv.reshape(B, S, 3, N_HEADS, HEAD_DIM)
        qkv = jnp.transpose(qkv, (2, 0, 3, 1, 4))                   # (3, B, nH, S, dH)
        ctx = attention(qkv[0], qkv[1], qkv[2], add_mask)           # (B, nH, S, dH)
        ctx = jnp.transpose(ctx, (0, 2, 1, 3)).reshape(B * S, H)
        # attention output projection fused with residual add + LayerNorm
        x = dense_add_layernorm(ctx, lp["wo"], lp["bo"], h, lp["ln1_g"], lp["ln1_b"])

        ff = dense(x, lp["w1"], lp["b1"], activation="gelu")
        # FFN down-projection fused with residual add + LayerNorm
        x = dense_add_layernorm(ff, lp["w2"], lp["b2"], x, lp["ln2_g"], lp["ln2_b"])

    # --- pooler + dropout + classifier (fused) ---
    cls_tok = x.reshape(B, S, H)[:, 0, :]                           # (B, H)
    # TODO(synk): training-mode dropout (p=0.3, scaled masking) omitted; eval semantics = identity.
    logits = pool_and_classify(cls_tok, params["pool_w"], params["pool_b"],
                               params["cls_w"], params["cls_b"])
    return logits


# ---------------------------------- main ----------------------------------
if __name__ == "__main__":
    key = jax.random.PRNGKey(0)
    kp, kid = jax.random.split(key)

    params = init_params(kp)

    B, S = 2, 8
    ids = jax.random.randint(kid, (B, S), 2, VOCAB, dtype=jnp.int32)
    mask = jnp.ones((B, S), dtype=jnp.int32).at[1, 6:].set(0)   # pad last tokens of row 1
    token_type_ids = jnp.zeros((B, S), dtype=jnp.int32)

    logits = roberta_classifier_forward(params, ids, mask, token_type_ids)
    jax.block_until_ready(logits)
    assert logits.shape == (B, N_CLASSES) and logits.dtype == jnp.float32
    print("KERNEL_OK")
</pallas_src>

<mosaic_0001>
module attributes {stable_mosaic.version = 11 : i64} {
  func.func @_ln_kernel(%arg0: i32, %arg1: memref<16x32xf32, #tpu.memory_space<vmem>>, %arg2: memref<1x32xf32, #tpu.memory_space<vmem>>, %arg3: memref<1x32xf32, #tpu.memory_space<vmem>>, %arg4: memref<16x32xbf16, #tpu.memory_space<vmem>>) attributes {dimension_semantics = [#tpu.dimension_semantics<parallel>], iteration_bounds = array<i64: 1>, scalar_prefetch = 0 : i64, scratch_operands = 0 : i64, tpu.core_type = #tpu.core_type<tc>, window_params = [{transform_indices = @transform_0, window_bounds = array<i64: 16, 32>}, {pipeline_mode = #tpu.pipeline_mode<synchronous>, transform_indices = @transform_1, window_bounds = array<i64: 1, 32>}, {pipeline_mode = #tpu.pipeline_mode<synchronous>, transform_indices = @transform_2, window_bounds = array<i64: 1, 32>}, {transform_indices = @transform_3, window_bounds = array<i64: 16, 32>}]} {
    %c0 = arith.constant 0 : index
    %c0_0 = arith.constant 0 : index
    %0 = vector.load %arg1[%c0, %c0_0] : memref<16x32xf32, #tpu.memory_space<vmem>>, vector<16x32xf32>
    %cst = arith.constant dense<0.000000e+00> : vector<16xf32>
    %1 = vector.multi_reduction <add>, %0, %cst [1] : vector<16x32xf32> to vector<16xf32>
    %2 = vector.shape_cast %1 : vector<16xf32> to vector<16x1xf32>
    %cst_1 = arith.constant 3.200000e+01 : f32
    %3 = vector.broadcast %cst_1 : f32 to vector<16x1xf32>
    %4 = arith.divf %2, %3 : vector<16x1xf32>
    %5 = vector.broadcast %4 : vector<16x1xf32> to vector<16x32xf32>
    %6 = arith.subf %0, %5 : vector<16x32xf32>
    %7 = arith.mulf %6, %6 : vector<16x32xf32>
    %cst_2 = arith.constant dense<0.000000e+00> : vector<16xf32>
    %8 = vector.multi_reduction <add>, %7, %cst_2 [1] : vector<16x32xf32> to vector<16xf32>
    %9 = vector.shape_cast %8 : vector<16xf32> to vector<16x1xf32>
    %cst_3 = arith.constant 3.200000e+01 : f32
    %10 = vector.broadcast %cst_3 : f32 to vector<16x1xf32>
    %11 = arith.divf %9, %10 : vector<16x1xf32>
    %12 = vector.broadcast %4 : vector<16x1xf32> to vector<16x32xf32>
    %13 = arith.subf %0, %12 : vector<16x32xf32>
    %cst_4 = arith.constant 9.99999974E-6 : f32
    %14 = vector.broadcast %cst_4 : f32 to vector<16x1xf32>
    %15 = arith.addf %11, %14 : vector<16x1xf32>
    %16 = math.rsqrt %15 : vector<16x1xf32>
    %17 = vector.broadcast %16 : vector<16x1xf32> to vector<16x32xf32>
    %18 = arith.mulf %13, %17 : vector<16x32xf32>
    %c0_5 = arith.constant 0 : index
    %c0_6 = arith.constant 0 : index
    %19 = vector.load %arg2[%c0_5, %c0_6] : memref<1x32xf32, #tpu.memory_space<vmem>>, vector<1x32xf32>
    %20 = vector.broadcast %19 : vector<1x32xf32> to vector<16x32xf32>
    %21 = arith.mulf %18, %20 : vector<16x32xf32>
    %c0_7 = arith.constant 0 : index
    %c0_8 = arith.constant 0 : index
    %22 = vector.load %arg3[%c0_7, %c0_8] : memref<1x32xf32, #tpu.memory_space<vmem>>, vector<1x32xf32>
    %23 = vector.broadcast %22 : vector<1x32xf32> to vector<16x32xf32>
    %24 = arith.addf %21, %23 : vector<16x32xf32>
    %25 = arith.truncf %24 : vector<16x32xf32> to vector<16x32xbf16>
    %c0_9 = arith.constant 0 : index
    %c0_10 = arith.constant 0 : index
    %26 = vector.load %arg4[%c0_9, %c0_10] : memref<16x32xbf16, #tpu.memory_space<vmem>>, vector<16x32xbf16>
    tpu.vector_store %arg4[%c0_9, %c0_10], %25 {strides = array<i32>} : memref<16x32xbf16, #tpu.memory_space<vmem>>, vector<16x32xbf16>,
    return
  }
  func.func @transform_0(%arg0: i32) -> (i32, i32) {
    %c0_i32 = arith.constant 0 : i32
    %c0_i32_0 = arith.constant 0 : i32
    return %arg0, %c0_i32 : i32, i32
  }
  func.func @transform_1(%arg0: i32) -> (i32, i32) {
    %c0_i32 = arith.constant 0 : i32
    %c0_i32_0 = arith.constant 0 : i32
    %c0_i32_1 = arith.constant 0 : i32
    return %c0_i32, %c0_i32_0 : i32, i32
  }
  func.func @transform_2(%arg0: i32) -> (i32, i32) {
    %c0_i32 = arith.constant 0 : i32
    %c0_i32_0 = arith.constant 0 : i32
    %c0_i32_1 = arith.constant 0 : i32
    return %c0_i32, %c0_i32_0 : i32, i32
  }
  func.func @transform_3(%arg0: i32) -> (i32, i32) {
    %c0_i32 = arith.constant 0 : i32
    %c0_i32_0 = arith.constant 0 : i32
    return %arg0, %c0_i32 : i32, i32
  }
}

</mosaic_0001>

<llo_original>
// kernel: tpu_custom_call.1
$region0: #{tpu_custom_call.1}
  #allocation0 [shape = 'u32[]', space=smem, size = 0x4, offset = 0x4, fixed_abs, tag = 'smem constant byte address 0x4 - core index']
  #allocation1 [shape = 'u32[72,128]{1,0:T(1,128)}', space=vmem, size = 0x9000, scoped, tag = 'internal scratch']
  %s0 = inlined_call_operand.hbm [shape: f32[16,32], index: 0, kind: input, shape index: {}]
  %s1 = inlined_call_operand.hbm [shape: f32[1,32], index: 1, kind: input, shape index: {}]
  %s2 = inlined_call_operand.vmem [shape: f32[1,32], index: 2, kind: input, shape index: {}]
  %s3 = inlined_call_operand.hbm [shape: bf16[16,32], index: 3, kind: output, shape index: {}]
  %s4 = sld [smem:[#allocation0]]
  $region30: #{tpu_custom_call.1} parent=0
    _
  %s6 = ssub.s32 1, %s4
  %s7 = scalar_select 0, %s6, %s4
  $region1: #{tpu_custom_call.1} parent=0
    #allocation2 [shape = 'u8[8192]{0}', space=vmem, size = 0x2000, scoped, tag = 'input window, operand 0, single buffered']
    #allocation3 [shape = 's32[1]{0}', space=sflag, size = 0x4, scoped, tag = 'scoped memory for tpu_custom_call.1']
    #allocation4 [shape = 's32[1]{0}', space=sflag, size = 0x4, scoped, tag = 'scoped memory for tpu_custom_call.1']
    #allocation5 [shape = 'u8[512]{0}', space=vmem, size = 0x400, scoped, tag = 'input window, operand 1, single buffered']
    #allocation6 [shape = 's32[1]{0}', space=sflag, size = 0x4, scoped, tag = 'scoped memory for tpu_custom_call.1']
    #allocation7 [shape = 'u8[4096]{0}', space=vmem, size = 0x1000, scoped, tag = 'output window, operand 0, single buffered']
    %8 = vsyncpa [#allocation3], 0
    %9 = vsyncpa [#allocation6], 0
    %10 = vsyncpa [#allocation4], 0
    // Predicated region
    $region2: #{tpu_custom_call.1} parent=1 // pred_check
      _
    $region3: #{tpu_custom_call.1} parent=1 // pred_check_branch
      %12 = sbr.rel (0) target = $region5
    $region4: #{tpu_custom_call.1} parent=1 // pred_region
      %14 = vsyncadd [#allocation3], 0
      %s15 = sshll.u32 %s0, 4
      %s16 = int_to_ptr.hbm [resolvable:$true] %s15
      %s17 = sshll.u32 [#allocation2], 4
      %s18 = int_to_ptr.vmem [resolvable:$true] %s17
      %23 = dma.hbm_to_vmem [thread:$0]  %s16, 256, %s18, [#allocation3], 128, 128, 8
    $region5: #{tpu_custom_call.1} parent=1 // pred_fallthru
      _
    // Predicated region
    $region6: #{tpu_custom_call.1} parent=1 // pred_check
      _
    $region7: #{tpu_custom_call.1} parent=1 // pred_check_branch
      %25 = sbr.rel (0) target = $region9
    $region8: #{tpu_custom_call.1} parent=1 // pred_region
      %27 = vsyncadd [#allocation6], 0
      %s29 = sshll.u32 %s1, 4
      %s30 = int_to_ptr.hbm [resolvable:$true] %s29
      %s31 = sshll.u32 [#allocation5], 4
      %s32 = int_to_ptr.vmem [resolvable:$true] %s31
      %34 = dma.hbm_to_vmem [thread:$0]  %s30, 16, %s32, [#allocation6]
    $region9: #{tpu_custom_call.1} parent=1 // pred_fallthru
      _
    // Predicated region
    $region10: #{tpu_custom_call.1} parent=1 // pred_check
      _
    $region11: #{tpu_custom_call.1} parent=1 // pred_check_branch
      %36 = sbr.rel (0) target = $region13
    $region12: #{tpu_custom_call.1} parent=1 // pred_region
      _
    $region13: #{tpu_custom_call.1} parent=1 // pred_fallthru
      _
    // Predicated region
    $region14: #{tpu_custom_call.1} parent=1 // pred_check
      _
    $region15: #{tpu_custom_call.1} parent=1 // pred_check_branch
      %38 = sbr.rel (0) target = $region17
    $region16: #{tpu_custom_call.1} parent=1 // pred_region
      %40 = dma.done [#allocation3], 256
    $region17: #{tpu_custom_call.1} parent=1 // pred_fallthru
      _
    // Predicated region
    $region18: #{tpu_custom_call.1} parent=1 // pred_check
      _
    $region19: #{tpu_custom_call.1} parent=1 // pred_check_branch
      %42 = sbr.rel (0) target = $region21
    $region20: #{tpu_custom_call.1} parent=1 // pred_region
      %44 = dma.done [#allocation6], 16
    $region21: #{tpu_custom_call.1} parent=1 // pred_fallthru
      _
    %v45 = vld [vmem:[#allocation2] sm:$0xff]
    %v46 = vld [vmem:[#allocation2 + $0x8] sm:$0xff]
    %vm47 = vcmask 261120
    %v48 = vsel %vm47, %v45, 0.0
    %49 = vadd.xlane.f32.xlu0 %v48
    %v50 = vpop.xlane.xlu0 %49
    %v51 = vsel %vm47, %v46, 0.0
    %52 = vadd.xlane.f32.xlu0 %v51
    %v53 = vpop.xlane.xlu0 %52
    %v54 = vrcp.pop 32.0
    %v55 = vmul.f32 32.0, %v54
    %v56 = vsub.f32 1.0, %v55
    %v57 = vmul.f32 %v54, %v56
    %v58 = vadd.f32 %v54, %v57
    %vm59 = vweird.f32 %v54
    %v60 = vsel %vm59, %v54, %v58
    %v61 = vmul.f32 %v50, %v60
    %v62 = vmul.f32 %v53, %v60
    %v63 = vsub.f32 %v45, %v61
    %v64 = vsub.f32 %v46, %v62
    %v65 = vmul.f32 %v63, %v63
    %v66 = vmul.f32 %v64, %v64
    %v67 = vsel %vm47, %v65, 0.0
    %68 = vadd.xlane.f32.xlu0 %v67
    %v69 = vpop.xlane.xlu0 %68
    %v70 = vsel %vm47, %v66, 0.0
    %71 = vadd.xlane.f32.xlu0 %v70
    %v72 = vpop.xlane.xlu0 %71
    %v73 = vmul.f32 %v69, %v60
    %v74 = vmul.f32 %v72, %v60
    %v75 = vadd.f32 %v73, 1e-05
    %v76 = vadd.f32 %v74, 1e-05
    %v77 = vrsqrt.pop %v75
    %v78 = vmul.f32 %v77, %v75
    %v79 = vmul.f32 %v78, %v77
    %v80 = vmul.f32 0.5, %v79
    %v81 = vsub.f32 1.5, %v80
    %v82 = vmul.f32 %v77, %v81
    %vm83 = vweird.f32 %v75
    %vm84 = vweird.f32 %v77
    %vm85 = vmor %vm83, %vm84
    %v86 = vsel %vm85, %v77, %v82
    %v87 = vrsqrt.pop %v76
    %v88 = vmul.f32 %v87, %v76
    %v89 = vmul.f32 %v88, %v87
    %v90 = vmul.f32 0.5, %v89
    %v91 = vsub.f32 1.5, %v90
    %v92 = vmul.f32 %v87, %v91
    %vm93 = vweird.f32 %v76
    %vm94 = vweird.f32 %v87
    %vm95 = vmor %vm93, %vm94
    %v96 = vsel %vm95, %v87, %v92
    %v97 = vmul.f32 %v63, %v86
    %v98 = vmul.f32 %v64, %v96
    %v99 = vld [vmem:[#allocation5] sm:$0x1]
    %v101 = vperm.slane %v99, 0
    %v103 = vmul.f32 %v97, %v101
    %v104 = vmul.f32 %v98, %v101
    %v105 = vld [vmem:[%s2] sm:$0x1]
    %v107 = vperm.slane %v105, 0
    %v109 = vadd.f32 %v103, %v107
    %v110 = vadd.f32 %v104, %v107
    %v111 = vpack.c.bf16 %v109, %v109
    %v112 = vpack.c.bf16 %v110, %v110
    %vm113 = vcmask 257024
    %114 = vst.msk [vmem:[#allocation7] sm:$0xf] %vm113, %v111
    %115 = vst.msk [vmem:[#allocation7 + $0x4] sm:$0xf] %vm113, %v112
    // Predicated region
    $region22: #{tpu_custom_call.1} parent=1 // pred_check
      _
    $region23: #{tpu_custom_call.1} parent=1 // pred_check_branch
      %117 = sbr.rel (0) target = $region25
    $region24: #{tpu_custom_call.1} parent=1 // pred_region
      %119 = vsyncadd [#allocation4], 0
      %s120 = sshll.u32 [#allocation7], 4
      %s121 = int_to_ptr.vmem [resolvable:$true] %s120
      %s122 = sshll.u32 %s3, 4
      %s123 = int_to_ptr.hbm [resolvable:$true] %s122
      %128 = dma.vmem_to_hbm [thread:$0]  %s121, 128, %s123, [#allocation4], 64, 64, 4
    $region25: #{tpu_custom_call.1} parent=1 // pred_fallthru
      _
    // Predicated region
    $region26: #{tpu_custom_call.1} parent=1 // pred_check
      _
    $region27: #{tpu_custom_call.1} parent=1 // pred_check_branch
      %130 = sbr.rel (0) target = $region29
    $region28: #{tpu_custom_call.1} parent=1 // pred_region
      %132 = dma.done [#allocation4], 128
    $region29: #{tpu_custom_call.1} parent=1 // pred_fallthru
      _
    %133 = vsyncpa [#allocation3], 1
    %134 = vsyncpa [#allocation6], 1
    %135 = vsyncpa [#allocation4], 1

</llo_original>
